<compile_context>
chip_gen: v5e
topology: v5e:2x2
jax: 0.10.0
libtpu: 0.0.40
codegen_flags: <defaults>
</compile_context>

<pallas_src>
import jax
import jax.numpy as jnp
from jax.experimental import pallas as pl
from jax.experimental.pallas import tpu as pltpu


# bf16 operands for the MXU (f32 accumulation). Flip to jnp.float32 for exact
# parity with the f32 PyTorch reference.
MATMUL_DTYPE = jnp.bfloat16


# ----------------------------------------------------------------------------
# Fused forward kernel (single invocation, everything VMEM-resident)
# ----------------------------------------------------------------------------
def _fused_kernel(emb_ref, ebias_ref, a_ref, w1_ref, b1_ref, w2_ref, b2_ref,
                  rel_ref, sidx_ref, pidx_ref, oidx_ref,
                  scores_ref, pen_ref):
    f32 = jnp.float32
    n = emb_ref.shape[0]                 # nodes
    r = a_ref.shape[0] // n              # stacked relations (2*nrel + 1)
    t = sidx_ref.shape[0]                # triples
    nrel = rel_ref.shape[0]              # decoder relations

    a = a_ref[...]                       # [R*N, N], already MATMUL_DTYPE

    def rgcn(x, w_ref, b_ref):
        # (1) aggregate neighbours for ALL relations in one MXU call:
        #     [R*N, N] @ [N, F_in] -> [R*N, F_in]
        ax = jnp.dot(a, x.astype(a.dtype), preferred_element_type=f32)
        # (2) repack the relation blocks from sublanes onto lanes:
        #     [R*N, F_in] -> [N, R*F_in]   (static slices, in-register concat)
        ax_wide = jnp.concatenate(
            [ax[i * n:(i + 1) * n, :] for i in range(r)], axis=1)
        # (3) one big contraction over (relation, in_feature): K = R*F_in.
        out = jnp.dot(ax_wide.astype(w_ref.dtype), w_ref[...],
                      preferred_element_type=f32)
        return out + b_ref[...]

    # --- encoder ---
    x = jnp.maximum(emb_ref[...] + ebias_ref[...], 0.0)    # relu(emb + bias)
    x = jnp.maximum(rgcn(x, w1_ref, b1_ref), 0.0)           # RGCN layer 1 + relu
    x = rgcn(x, w2_ref, b2_ref)                             # RGCN layer 2

    # --- DistMult decoder: in-kernel gather, x never leaves VMEM ---
    node_iota = jax.lax.broadcasted_iota(jnp.int32, (t, n), 1)
    rel_iota = jax.lax.broadcasted_iota(jnp.int32, (t, nrel), 1)
    s_oh = (node_iota == sidx_ref[...]).astype(f32)          # [T, N]
    o_oh = (node_iota == oidx_ref[...]).astype(f32)          # [T, N]
    p_oh = (rel_iota == pidx_ref[...]).astype(f32)           # [T, nrel]

    s_emb = jnp.dot(s_oh, x, preferred_element_type=f32)             # [T, F]
    o_emb = jnp.dot(o_oh, x, preferred_element_type=f32)             # [T, F]
    r_emb = jnp.dot(p_oh, rel_ref[...], preferred_element_type=f32)  # [T, F]

    scores_ref[...] = jnp.sum(s_emb * r_emb * o_emb, axis=1, keepdims=True)

    # decoder L2 penalty (plain variant: sum(relations ** 2))
    # TODO(synk): 'schlichtkrull-l2' per-batch penalty variant not implemented.
    rel = rel_ref[...]
    pen_ref[...] = jnp.sum(jnp.sum(rel * rel, axis=1, keepdims=True),
                           axis=0, keepdims=True)


# ----------------------------------------------------------------------------
# Wrapper: pure layout prep outside, single pallas_call inside
# ----------------------------------------------------------------------------
@jax.jit
def relation_predictor_forward(params, adj, triples):
    """adj: [R, N, N] dense relational adjacency (R = 2*nrel + 1, row-normalised,
    self-loops in the last slot); triples: [T, 3] int32 (subject, pred, object)."""
    nnodes, nemb = params["node_embeddings"].shape
    R = adj.shape[0]
    nhid1 = params["w1"].shape[2]
    nhid2 = params["w2"].shape[2]
    T = triples.shape[0]

    # Pure layout prep (no per-relation compute): vertically stacked adjacency
    # and row-flattened weights so each RGCN layer is two large contractions.
    a_v = adj.reshape(R * nnodes, nnodes).astype(MATMUL_DTYPE)          # [R*N, N]
    w1f = params["w1"].reshape(R * nemb, nhid1).astype(MATMUL_DTYPE)    # [R*F, F]
    w2f = params["w2"].reshape(R * nhid1, nhid2).astype(MATMUL_DTYPE)   # [R*F, F]

    s_idx = triples[:, 0:1].astype(jnp.int32)   # [T, 1]
    p_idx = triples[:, 1:2].astype(jnp.int32)   # [T, 1]
    o_idx = triples[:, 2:3].astype(jnp.int32)   # [T, 1]

    # Everything (adjacency, both weight stacks, features, indices) is VMEM
    # resident with large headroom at these shapes.
    # TODO(synk): when N grows (v7x only has 64 MiB VMEM), tile node rows with a
    # 'parallel' grid axis (adjacency block (tm, N)) and set
    # pltpu.CompilerParams(vmem_limit_bytes=...) instead of keeping A resident.
    resident_bytes = 4 * (params["node_embeddings"].size + a_v.size
                          + w1f.size + w2f.size)
    assert resident_bytes < 8 * 1024 * 1024, "graph too large for fused kernel"

    vmem = pl.BlockSpec(memory_space=pltpu.MemorySpace.VMEM)
    scores, penalty = pl.pallas_call(
        _fused_kernel,
        out_shape=(jax.ShapeDtypeStruct((T, 1), jnp.float32),
                   jax.ShapeDtypeStruct((1, 1), jnp.float32)),
        in_specs=[vmem] * 11,
        out_specs=(vmem, vmem),
    )(params["node_embeddings"], params["node_embeddings_bias"],
      a_v, w1f, params["b1"], w2f, params["b2"],
      params["relations"], s_idx, p_idx, o_idx)

    return scores[:, 0], penalty[0, 0]


# ----------------------------------------------------------------------------
# Deterministic parameter / input construction
# ----------------------------------------------------------------------------
def build_params_and_inputs():
    nnodes = 16
    nrel = 3
    nemb = 32        # node_embedding
    nhid1 = 32       # hidden1_size
    nhid2 = 32       # hidden2_size (== nemb so DistMult dims line up)
    ntriples = 8
    R = 2 * nrel + 1  # relations + inverses + self-loop

    key = jax.random.PRNGKey(0)
    keys = jax.random.split(key, 8)

    def glorot(k, shape):
        fan_in, fan_out = shape[-2], shape[-1]
        lim = jnp.sqrt(6.0 / (fan_in + fan_out))
        return jax.random.uniform(k, shape, jnp.float32, -lim, lim)

    params = {
        "node_embeddings": glorot(keys[0], (nnodes, nemb)),
        "node_embeddings_bias": jnp.zeros((1, nemb), jnp.float32),
        "w1": glorot(keys[1], (R, nemb, nhid1)),
        "b1": jnp.zeros((1, nhid1), jnp.float32),
        "w2": glorot(keys[2], (R, nhid1, nhid2)),
        "b2": jnp.zeros((1, nhid2), jnp.float32),
        "relations": glorot(keys[3], (nrel, nemb)),  # DistMult relation embeddings
    }

    # dense relational adjacency; last relation slot = self-loops
    adj_rand = (jax.random.uniform(keys[4], (R, nnodes, nnodes)) < 0.2).astype(jnp.float32)
    eye = jnp.eye(nnodes, dtype=jnp.float32)
    adj = adj_rand.at[R - 1].set(eye)
    # simple row normalization (edge_dropout disabled)
    deg = jnp.clip(adj.sum(axis=-1, keepdims=True), 1.0, None)
    adj = adj / deg

    # triples: (subject, predicate, object)
    s = jax.random.randint(keys[5], (ntriples,), 0, nnodes)
    p = jax.random.randint(keys[6], (ntriples,), 0, nrel)
    o = jax.random.randint(keys[7], (ntriples,), 0, nnodes)
    triples = jnp.stack([s, p, o], axis=1).astype(jnp.int32)

    return params, adj, triples


if __name__ == "__main__":
    params, adj, triples = build_params_and_inputs()
    scores, penalty = relation_predictor_forward(params, adj, triples)
    jax.block_until_ready((scores, penalty))
    assert scores.shape == (triples.shape[0],)
    assert penalty.shape == ()
    assert bool(jnp.all(jnp.isfinite(scores))) and bool(jnp.isfinite(penalty))
    print("KERNEL_OK")
</pallas_src>

<mosaic_0001>
module attributes {stable_mosaic.version = 11 : i64} {
  func.func @_fused_kernel(%arg0: memref<16x32xf32, #tpu.memory_space<vmem>>, %arg1: memref<1x32xf32, #tpu.memory_space<vmem>>, %arg2: memref<112x16xbf16, #tpu.memory_space<vmem>>, %arg3: memref<224x32xbf16, #tpu.memory_space<vmem>>, %arg4: memref<1x32xf32, #tpu.memory_space<vmem>>, %arg5: memref<224x32xbf16, #tpu.memory_space<vmem>>, %arg6: memref<1x32xf32, #tpu.memory_space<vmem>>, %arg7: memref<3x32xf32, #tpu.memory_space<vmem>>, %arg8: memref<8x1xi32, #tpu.memory_space<vmem>>, %arg9: memref<8x1xi32, #tpu.memory_space<vmem>>, %arg10: memref<8x1xi32, #tpu.memory_space<vmem>>, %arg11: memref<8x1xf32, #tpu.memory_space<vmem>>, %arg12: memref<1x1xf32, #tpu.memory_space<vmem>>) attributes {dimension_semantics = [], scalar_prefetch = 0 : i64, scratch_operands = 0 : i64, tpu.core_type = #tpu.core_type<tc>} {
    %c0 = arith.constant 0 : index
    %c0_0 = arith.constant 0 : index
    %0 = vector.load %arg2[%c0, %c0_0] : memref<112x16xbf16, #tpu.memory_space<vmem>>, vector<112x16xbf16>
    %c0_1 = arith.constant 0 : index
    %c0_2 = arith.constant 0 : index
    %1 = vector.load %arg0[%c0_1, %c0_2] : memref<16x32xf32, #tpu.memory_space<vmem>>, vector<16x32xf32>
    %c0_3 = arith.constant 0 : index
    %c0_4 = arith.constant 0 : index
    %2 = vector.load %arg1[%c0_3, %c0_4] : memref<1x32xf32, #tpu.memory_space<vmem>>, vector<1x32xf32>
    %3 = vector.broadcast %2 : vector<1x32xf32> to vector<16x32xf32>
    %4 = arith.addf %1, %3 : vector<16x32xf32>
    %cst = arith.constant 0.000000e+00 : f32
    %5 = vector.broadcast %cst : f32 to vector<16x32xf32>
    %6 = arith.maximumf %4, %5 : vector<16x32xf32>
    %7 = arith.truncf %6 : vector<16x32xf32> to vector<16x32xbf16>
    %cst_5 = arith.constant dense<0.000000e+00> : vector<112x32xf32>
    %8 = tpu.matmul %0, %7, %cst_5 {dimension_numbers = #tpu.dot_dimension_numbers<[1], [0], [0], [1], [0, 0, 1, 1], [], []>} : vector<112x16xbf16>, vector<16x32xbf16>, vector<112x32xf32> -> vector<112x32xf32>
    %9 = vector.extract_strided_slice %8 {offsets = [0, 0], sizes = [16, 32], strides = [1, 1]} : vector<112x32xf32> to vector<16x32xf32>
    %10 = vector.extract_strided_slice %8 {offsets = [16, 0], sizes = [16, 32], strides = [1, 1]} : vector<112x32xf32> to vector<16x32xf32>
    %11 = vector.extract_strided_slice %8 {offsets = [32, 0], sizes = [16, 32], strides = [1, 1]} : vector<112x32xf32> to vector<16x32xf32>
    %12 = vector.extract_strided_slice %8 {offsets = [48, 0], sizes = [16, 32], strides = [1, 1]} : vector<112x32xf32> to vector<16x32xf32>
    %13 = vector.extract_strided_slice %8 {offsets = [64, 0], sizes = [16, 32], strides = [1, 1]} : vector<112x32xf32> to vector<16x32xf32>
    %14 = vector.extract_strided_slice %8 {offsets = [80, 0], sizes = [16, 32], strides = [1, 1]} : vector<112x32xf32> to vector<16x32xf32>
    %15 = vector.extract_strided_slice %8 {offsets = [96, 0], sizes = [16, 32], strides = [1, 1]} : vector<112x32xf32> to vector<16x32xf32>
    %16 = tpu.concatenate %9, %10, %11, %12, %13, %14, %15 in 1 : vector<16x32xf32>, vector<16x32xf32>, vector<16x32xf32>, vector<16x32xf32>, vector<16x32xf32>, vector<16x32xf32>, vector<16x32xf32> -> vector<16x224xf32>
    %17 = arith.truncf %16 : vector<16x224xf32> to vector<16x224xbf16>
    %c0_6 = arith.constant 0 : index
    %c0_7 = arith.constant 0 : index
    %18 = vector.load %arg3[%c0_6, %c0_7] : memref<224x32xbf16, #tpu.memory_space<vmem>>, vector<224x32xbf16>
    %cst_8 = arith.constant dense<0.000000e+00> : vector<16x32xf32>
    %19 = tpu.matmul %17, %18, %cst_8 {dimension_numbers = #tpu.dot_dimension_numbers<[1], [0], [0], [1], [0, 0, 1, 1], [], []>} : vector<16x224xbf16>, vector<224x32xbf16>, vector<16x32xf32> -> vector<16x32xf32>
    %c0_9 = arith.constant 0 : index
    %c0_10 = arith.constant 0 : index
    %20 = vector.load %arg4[%c0_9, %c0_10] : memref<1x32xf32, #tpu.memory_space<vmem>>, vector<1x32xf32>
    %21 = vector.broadcast %20 : vector<1x32xf32> to vector<16x32xf32>
    %22 = arith.addf %19, %21 : vector<16x32xf32>
    %cst_11 = arith.constant 0.000000e+00 : f32
    %23 = vector.broadcast %cst_11 : f32 to vector<16x32xf32>
    %24 = arith.maximumf %22, %23 : vector<16x32xf32>
    %25 = arith.truncf %24 : vector<16x32xf32> to vector<16x32xbf16>
    %cst_12 = arith.constant dense<0.000000e+00> : vector<112x32xf32>
    %26 = tpu.matmul %0, %25, %cst_12 {dimension_numbers = #tpu.dot_dimension_numbers<[1], [0], [0], [1], [0, 0, 1, 1], [], []>} : vector<112x16xbf16>, vector<16x32xbf16>, vector<112x32xf32> -> vector<112x32xf32>
    %27 = vector.extract_strided_slice %26 {offsets = [0, 0], sizes = [16, 32], strides = [1, 1]} : vector<112x32xf32> to vector<16x32xf32>
    %28 = vector.extract_strided_slice %26 {offsets = [16, 0], sizes = [16, 32], strides = [1, 1]} : vector<112x32xf32> to vector<16x32xf32>
    %29 = vector.extract_strided_slice %26 {offsets = [32, 0], sizes = [16, 32], strides = [1, 1]} : vector<112x32xf32> to vector<16x32xf32>
    %30 = vector.extract_strided_slice %26 {offsets = [48, 0], sizes = [16, 32], strides = [1, 1]} : vector<112x32xf32> to vector<16x32xf32>
    %31 = vector.extract_strided_slice %26 {offsets = [64, 0], sizes = [16, 32], strides = [1, 1]} : vector<112x32xf32> to vector<16x32xf32>
    %32 = vector.extract_strided_slice %26 {offsets = [80, 0], sizes = [16, 32], strides = [1, 1]} : vector<112x32xf32> to vector<16x32xf32>
    %33 = vector.extract_strided_slice %26 {offsets = [96, 0], sizes = [16, 32], strides = [1, 1]} : vector<112x32xf32> to vector<16x32xf32>
    %34 = tpu.concatenate %27, %28, %29, %30, %31, %32, %33 in 1 : vector<16x32xf32>, vector<16x32xf32>, vector<16x32xf32>, vector<16x32xf32>, vector<16x32xf32>, vector<16x32xf32>, vector<16x32xf32> -> vector<16x224xf32>
    %35 = arith.truncf %34 : vector<16x224xf32> to vector<16x224xbf16>
    %c0_13 = arith.constant 0 : index
    %c0_14 = arith.constant 0 : index
    %36 = vector.load %arg5[%c0_13, %c0_14] : memref<224x32xbf16, #tpu.memory_space<vmem>>, vector<224x32xbf16>
    %cst_15 = arith.constant dense<0.000000e+00> : vector<16x32xf32>
    %37 = tpu.matmul %35, %36, %cst_15 {dimension_numbers = #tpu.dot_dimension_numbers<[1], [0], [0], [1], [0, 0, 1, 1], [], []>} : vector<16x224xbf16>, vector<224x32xbf16>, vector<16x32xf32> -> vector<16x32xf32>
    %c0_16 = arith.constant 0 : index
    %c0_17 = arith.constant 0 : index
    %38 = vector.load %arg6[%c0_16, %c0_17] : memref<1x32xf32, #tpu.memory_space<vmem>>, vector<1x32xf32>
    %39 = vector.broadcast %38 : vector<1x32xf32> to vector<16x32xf32>
    %40 = arith.addf %37, %39 : vector<16x32xf32>
    %41 = tpu.iota {dimensions = array<i32: 1>} : vector<8x16xi32>
    %42 = tpu.iota {dimensions = array<i32: 1>} : vector<8x3xi32>
    %c0_18 = arith.constant 0 : index
    %c0_19 = arith.constant 0 : index
    %43 = vector.load %arg8[%c0_18, %c0_19] : memref<8x1xi32, #tpu.memory_space<vmem>>, vector<8x1xi32>
    %44 = vector.broadcast %43 : vector<8x1xi32> to vector<8x16xi32>
    %45 = arith.cmpi eq, %41, %44 : vector<8x16xi32>
    %46 = arith.extui %45 : vector<8x16xi1> to vector<8x16xi32>
    %47 = arith.sitofp %46 : vector<8x16xi32> to vector<8x16xf32>
    %c0_20 = arith.constant 0 : index
    %c0_21 = arith.constant 0 : index
    %48 = vector.load %arg10[%c0_20, %c0_21] : memref<8x1xi32, #tpu.memory_space<vmem>>, vector<8x1xi32>
    %49 = vector.broadcast %48 : vector<8x1xi32> to vector<8x16xi32>
    %50 = arith.cmpi eq, %41, %49 : vector<8x16xi32>
    %51 = arith.extui %50 : vector<8x16xi1> to vector<8x16xi32>
    %52 = arith.sitofp %51 : vector<8x16xi32> to vector<8x16xf32>
    %c0_22 = arith.constant 0 : index
    %c0_23 = arith.constant 0 : index
    %53 = vector.load %arg9[%c0_22, %c0_23] : memref<8x1xi32, #tpu.memory_space<vmem>>, vector<8x1xi32>
    %54 = vector.broadcast %53 : vector<8x1xi32> to vector<8x3xi32>
    %55 = arith.cmpi eq, %42, %54 : vector<8x3xi32>
    %56 = arith.extui %55 : vector<8x3xi1> to vector<8x3xi32>
    %57 = arith.sitofp %56 : vector<8x3xi32> to vector<8x3xf32>
    %cst_24 = arith.constant dense<0.000000e+00> : vector<8x32xf32>
    %58 = tpu.matmul %47, %40, %cst_24 {dimension_numbers = #tpu.dot_dimension_numbers<[1], [0], [0], [1], [0, 0, 1, 1], [], []>} : vector<8x16xf32>, vector<16x32xf32>, vector<8x32xf32> -> vector<8x32xf32>
    %cst_25 = arith.constant dense<0.000000e+00> : vector<8x32xf32>
    %59 = tpu.matmul %52, %40, %cst_25 {dimension_numbers = #tpu.dot_dimension_numbers<[1], [0], [0], [1], [0, 0, 1, 1], [], []>} : vector<8x16xf32>, vector<16x32xf32>, vector<8x32xf32> -> vector<8x32xf32>
    %c0_26 = arith.constant 0 : index
    %c0_27 = arith.constant 0 : index
    %60 = vector.load %arg7[%c0_26, %c0_27] : memref<3x32xf32, #tpu.memory_space<vmem>>, vector<3x32xf32>
    %cst_28 = arith.constant dense<0.000000e+00> : vector<8x32xf32>
    %61 = tpu.matmul %57, %60, %cst_28 {dimension_numbers = #tpu.dot_dimension_numbers<[1], [0], [0], [1], [0, 0, 1, 1], [], []>} : vector<8x3xf32>, vector<3x32xf32>, vector<8x32xf32> -> vector<8x32xf32>
    %62 = arith.mulf %58, %61 : vector<8x32xf32>
    %63 = arith.mulf %62, %59 : vector<8x32xf32>
    %cst_29 = arith.constant dense<0.000000e+00> : vector<8xf32>
    %64 = vector.multi_reduction <add>, %63, %cst_29 [1] : vector<8x32xf32> to vector<8xf32>
    %65 = vector.shape_cast %64 : vector<8xf32> to vector<8x1xf32>
    %c0_30 = arith.constant 0 : index
    %c0_31 = arith.constant 0 : index
    %66 = vector.load %arg11[%c0_30, %c0_31] : memref<8x1xf32, #tpu.memory_space<vmem>>, vector<8x1xf32>
    tpu.vector_store %arg11[%c0_30, %c0_31], %65 {strides = array<i32>} : memref<8x1xf32, #tpu.memory_space<vmem>>, vector<8x1xf32>,
    %c0_32 = arith.constant 0 : index
    %c0_33 = arith.constant 0 : index
    %67 = vector.load %arg7[%c0_32, %c0_33] : memref<3x32xf32, #tpu.memory_space<vmem>>, vector<3x32xf32>
    %68 = arith.mulf %67, %67 : vector<3x32xf32>
    %cst_34 = arith.constant dense<0.000000e+00> : vector<3xf32>
    %69 = vector.multi_reduction <add>, %68, %cst_34 [1] : vector<3x32xf32> to vector<3xf32>
    %70 = vector.shape_cast %69 : vector<3xf32> to vector<3x1xf32>
    %cst_35 = arith.constant dense<0.000000e+00> : vector<1xf32>
    %71 = vector.multi_reduction <add>, %70, %cst_35 [0] : vector<3x1xf32> to vector<1xf32>
    %72 = vector.shape_cast %71 : vector<1xf32> to vector<1x1xf32>
    %c0_36 = arith.constant 0 : index
    %c0_37 = arith.constant 0 : index
    %73 = vector.load %arg12[%c0_36, %c0_37] : memref<1x1xf32, #tpu.memory_space<vmem>>, vector<1x1xf32>
    tpu.vector_store %arg12[%c0_36, %c0_37], %72 {strides = array<i32>} : memref<1x1xf32, #tpu.memory_space<vmem>>, vector<1x1xf32>,
    return
  }
}

</mosaic_0001>

<llo_original>
// kernel: relation_predictor_forward.1
$region0: #{relation_predictor_forward.1}
  #allocation0 [shape = 'u32[]', space=smem, size = 0x4, offset = 0x4, fixed_abs, tag = 'smem constant byte address 0x4 - core index']
  #allocation1 [shape = 'u32[72,128]{1,0:T(1,128)}', space=vmem, size = 0x9000, scoped, tag = 'internal scratch']
  %s0 = inlined_call_operand.vmem [shape: f32[16,32], index: 0, kind: input, shape index: {}]
  %s1 = inlined_call_operand.vmem [shape: f32[1,32], index: 1, kind: input, shape index: {}]
  %s2 = inlined_call_operand.vmem [shape: bf16[112,16], index: 2, kind: input, shape index: {}]
  %s3 = inlined_call_operand.vmem [shape: bf16[224,32], index: 3, kind: input, shape index: {}]
  %s4 = inlined_call_operand.vmem [shape: f32[1,32], index: 4, kind: input, shape index: {}]
  %s5 = inlined_call_operand.vmem [shape: bf16[224,32], index: 5, kind: input, shape index: {}]
  %s6 = inlined_call_operand.vmem [shape: f32[1,32], index: 6, kind: input, shape index: {}]
  %s7 = inlined_call_operand.vmem [shape: f32[3,32], index: 7, kind: input, shape index: {}]
  %s8 = inlined_call_operand.vmem [shape: s32[8,1], index: 8, kind: input, shape index: {}]
  %s9 = inlined_call_operand.vmem [shape: s32[8,1], index: 9, kind: input, shape index: {}]
  %s10 = inlined_call_operand.vmem [shape: s32[8,1], index: 10, kind: input, shape index: {}]
  %s11 = inlined_call_operand.vmem [shape: f32[8,1], index: 11, kind: output, shape index: {0}]
  %s12 = inlined_call_operand.hbm [shape: f32[1,1], index: 12, kind: output, shape index: {1}]
  %13 = xla_tuple %s11, %s12
  %s14 = sld [smem:[#allocation0]]
  $region62: #{relation_predictor_forward.1} parent=0
    _
  %s16 = ssub.s32 1, %s14
  %s17 = scalar_select 0, %s16, %s14
  $region1: #{relation_predictor_forward.1} parent=0
    #allocation2 [shape = 'u8[512]{0}', space=vmem, size = 0x400, scoped, tag = 'output window, operand 1, single buffered']
    #allocation3 [shape = 's32[1]{0}', space=sflag, size = 0x4, scoped, tag = 'scoped memory for relation_predictor_forward.1']
    %18 = vsyncpa [#allocation3], 0
    // Predicated region
    $region2: #{relation_predictor_forward.1} parent=1 // pred_check
      _
    $region3: #{relation_predictor_forward.1} parent=1 // pred_check_branch
      %20 = sbr.rel (0) target = $region5
    $region4: #{relation_predictor_forward.1} parent=1 // pred_region
      _
    $region5: #{relation_predictor_forward.1} parent=1 // pred_fallthru
      _
    // Predicated region
    $region6: #{relation_predictor_forward.1} parent=1 // pred_check
      _
    $region7: #{relation_predictor_forward.1} parent=1 // pred_check_branch
      %22 = sbr.rel (0) target = $region9
    $region8: #{relation_predictor_forward.1} parent=1 // pred_region
      _
    $region9: #{relation_predictor_forward.1} parent=1 // pred_fallthru
      _
    // Predicated region
    $region10: #{relation_predictor_forward.1} parent=1 // pred_check
      _
    $region11: #{relation_predictor_forward.1} parent=1 // pred_check_branch
      %24 = sbr.rel (0) target = $region13
    $region12: #{relation_predictor_forward.1} parent=1 // pred_region
      _
    $region13: #{relation_predictor_forward.1} parent=1 // pred_fallthru
      _
    // Predicated region
    $region14: #{relation_predictor_forward.1} parent=1 // pred_check
      _
    $region15: #{relation_predictor_forward.1} parent=1 // pred_check_branch
      %26 = sbr.rel (0) target = $region17
    $region16: #{relation_predictor_forward.1} parent=1 // pred_region
      _
    $region17: #{relation_predictor_forward.1} parent=1 // pred_fallthru
      _
    // Predicated region
    $region18: #{relation_predictor_forward.1} parent=1 // pred_check
      _
    $region19: #{relation_predictor_forward.1} parent=1 // pred_check_branch
      %28 = sbr.rel (0) target = $region21
    $region20: #{relation_predictor_forward.1} parent=1 // pred_region
      _
    $region21: #{relation_predictor_forward.1} parent=1 // pred_fallthru
      _
    // Predicated region
    $region22: #{relation_predictor_forward.1} parent=1 // pred_check
      _
    $region23: #{relation_predictor_forward.1} parent=1 // pred_check_branch
      %30 = sbr.rel (0) target = $region25
    $region24: #{relation_predictor_forward.1} parent=1 // pred_region
      _
    $region25: #{relation_predictor_forward.1} parent=1 // pred_fallthru
      _
    // Predicated region
    $region26: #{relation_predictor_forward.1} parent=1 // pred_check
      _
    $region27: #{relation_predictor_forward.1} parent=1 // pred_check_branch
      %32 = sbr.rel (0) target = $region29
    $region28: #{relation_predictor_forward.1} parent=1 // pred_region
      _
    $region29: #{relation_predictor_forward.1} parent=1 // pred_fallthru
      _
    // Predicated region
    $region30: #{relation_predictor_forward.1} parent=1 // pred_check
      _
    $region31: #{relation_predictor_forward.1} parent=1 // pred_check_branch
      %34 = sbr.rel (0) target = $region33
    $region32: #{relation_predictor_forward.1} parent=1 // pred_region
      _
    $region33: #{relation_predictor_forward.1} parent=1 // pred_fallthru
      _
    // Predicated region
    $region34: #{relation_predictor_forward.1} parent=1 // pred_check
      _
    $region35: #{relation_predictor_forward.1} parent=1 // pred_check_branch
      %36 = sbr.rel (0) target = $region37
    $region36: #{relation_predictor_forward.1} parent=1 // pred_region
      _
    $region37: #{relation_predictor_forward.1} parent=1 // pred_fallthru
      _
    // Predicated region
    $region38: #{relation_predictor_forward.1} parent=1 // pred_check
      _
    $region39: #{relation_predictor_forward.1} parent=1 // pred_check_branch
      %38 = sbr.rel (0) target = $region41
    $region40: #{relation_predictor_forward.1} parent=1 // pred_region
      _
    $region41: #{relation_predictor_forward.1} parent=1 // pred_fallthru
      _
    // Predicated region
    $region42: #{relation_predictor_forward.1} parent=1 // pred_check
      _
    $region43: #{relation_predictor_forward.1} parent=1 // pred_check_branch
      %40 = sbr.rel (0) target = $region45
    $region44: #{relation_predictor_forward.1} parent=1 // pred_region
      _
    $region45: #{relation_predictor_forward.1} parent=1 // pred_fallthru
      _
    %v42 = vld [vmem:[%s2] sm:$0xf]
    %v43 = vld [vmem:[%s2 + $0x4] sm:$0xf]
    %v44 = vld [vmem:[%s2 + $0x8] sm:$0xf]
    %v45 = vld [vmem:[%s2 + $0xc] sm:$0xf]
    %v46 = vld [vmem:[%s2 + $0x10] sm:$0xf]
    %v47 = vld [vmem:[%s2 + $0x14] sm:$0xf]
    %v48 = vld [vmem:[%s2 + $0x18] sm:$0xf]
    %v49 = vld [vmem:[%s2 + $0x1c] sm:$0xf]
    %v50 = vld [vmem:[%s2 + $0x20] sm:$0xf]
    %v51 = vld [vmem:[%s2 + $0x24] sm:$0xf]
    %v52 = vld [vmem:[%s2 + $0x28] sm:$0xf]
    %v53 = vld [vmem:[%s2 + $0x2c] sm:$0xf]
    %v54 = vld [vmem:[%s2 + $0x30] sm:$0xf]
    %v55 = vld [vmem:[%s2 + $0x34] sm:$0xf]
    %v56 = vld [vmem:[%s0] sm:$0xff]
    %v57 = vld [vmem:[%s0 + $0x8] sm:$0xff]
    %v58 = vld [vmem:[%s1] sm:$0x1]
    %v60 = vperm.slane %v58, 0
    %v62 = vadd.f32 %v56, %v60
    %v63 = vadd.f32 %v57, %v60
    %v64 = vmax.f32 %v62, 0.0
    %v65 = vmax.f32 %v63, 0.0
    %v66 = vpack.c.bf16 %v65, %v64
    %v81 = vunpack.c.l.b16 %v42
    %v82 = vunpack.c.l.b16 %v43
    %v83 = vunpack.c.l.b16 %v44
    %v84 = vunpack.c.l.b16 %v45
    %v85 = vunpack.c.l.b16 %v46
    %v86 = vunpack.c.l.b16 %v47
    %v87 = vunpack.c.l.b16 %v48
    %v88 = vunpack.c.l.b16 %v49
    %v89 = vunpack.c.l.b16 %v50
    %v90 = vunpack.c.l.b16 %v51
    %v91 = vunpack.c.l.b16 %v52
    %v92 = vunpack.c.l.b16 %v53
    %v93 = vunpack.c.l.b16 %v54
    %v94 = vunpack.c.l.b16 %v55
    %v95 = vpack.c.b16 %v82, %v81
    %v96 = vpack.c.b16 %v84, %v83
    %v97 = vpack.c.b16 %v86, %v85
    %v98 = vpack.c.b16 %v88, %v87
    %v99 = vpack.c.b16 %v90, %v89
    %v100 = vpack.c.b16 %v92, %v91
    %v101 = vpack.c.b16 %v94, %v93
    %vm102 = vcmask 130048
    %v104 = vsel %vm102, %v95, 0
    %v107 = vsel %vm102, %v96, 0
    %v110 = vsel %vm102, %v97, 0
    %v113 = vsel %vm102, %v98, 0
    %v116 = vsel %vm102, %v99, 0
    %v119 = vsel %vm102, %v100, 0
    %v122 = vsel %vm102, %v101, 0
    %124 = vmatpush.bf16.msra.mxu0 0
    %125 = vmatpush.bf16.msra.mxu0 0
    %126 = vmatpush.bf16.msra.mxu0 0
    %127 = vmatpush.bf16.msra.mxu0 0
    %128 = vmatpush.bf16.msra.mxu0 0
    %129 = vmatpush.bf16.msra.mxu0 0
    %130 = vmatpush.bf16.msra.mxu0 0
    %131 = vmatpush.bf16.msra.mxu0 %v66
    %132 = vmatmul.bf16.gmra.mxu0 %v104
    %v133 = vpop.f32.mrf.mxu0
    %v134 = vadd.f32 0.0, %v133
    %v135 = vpop.f32.mrf.mxu0
    %v136 = vadd.f32 0.0, %v135
    %137 = vmatmul.bf16.gmra.mxu0 %v107
    %v138 = vpop.f32.mrf.mxu0
    %v139 = vadd.f32 0.0, %v138
    %v140 = vpop.f32.mrf.mxu0
    %v141 = vadd.f32 0.0, %v140
    %142 = vmatmul.bf16.gmra.mxu0 %v110
    %v143 = vpop.f32.mrf.mxu0
    %v144 = vadd.f32 0.0, %v143
    %v145 = vpop.f32.mrf.mxu0
    %v146 = vadd.f32 0.0, %v145
    %147 = vmatmul.bf16.gmra.mxu0 %v113
    %v148 = vpop.f32.mrf.mxu0
    %v149 = vadd.f32 0.0, %v148
    %v150 = vpop.f32.mrf.mxu0
    %v151 = vadd.f32 0.0, %v150
    %152 = vmatmul.bf16.gmra.mxu0 %v116
    %v153 = vpop.f32.mrf.mxu0
    %v154 = vadd.f32 0.0, %v153
    %v155 = vpop.f32.mrf.mxu0
    %v156 = vadd.f32 0.0, %v155
    %157 = vmatmul.bf16.gmra.mxu0 %v119
    %v158 = vpop.f32.mrf.mxu0
    %v159 = vadd.f32 0.0, %v158
    %v160 = vpop.f32.mrf.mxu0
    %v161 = vadd.f32 0.0, %v160
    %162 = vmatmul.bf16.gmra.mxu0 %v122
    %v163 = vpop.f32.mrf.mxu0
    %v164 = vadd.f32 0.0, %v163
    %v165 = vpop.f32.mrf.mxu0
    %v166 = vadd.f32 0.0, %v165
    %167 = vdwg.mxu0
    %170 = vrot.lane.b32.xlu0 %v139, 32
    %v171 = vpop.permute.xlu0 %170
    %172 = vrot.lane.b32.xlu0 %v141, 32
    %v173 = vpop.permute.xlu0 %172
    %178 = vrot.lane.b32.xlu0 %v144, 64
    %v179 = vpop.permute.xlu0 %178
    %180 = vrot.lane.b32.xlu0 %v146, 64
    %v181 = vpop.permute.xlu0 %180
    %186 = vrot.lane.b32.xlu0 %v149, 96
    %v187 = vpop.permute.xlu0 %186
    %188 = vrot.lane.b32.xlu0 %v151, 96
    %v189 = vpop.permute.xlu0 %188
    %194 = vrot.lane.b32.xlu0 %v159, 32
    %v195 = vpop.permute.xlu0 %194
    %196 = vrot.lane.b32.xlu0 %v161, 32
    %v197 = vpop.permute.xlu0 %196
    %202 = vrot.lane.b32.xlu0 %v164, 64
    %v203 = vpop.permute.xlu0 %202
    %204 = vrot.lane.b32.xlu0 %v166, 64
    %v205 = vpop.permute.xlu0 %204
    %vm208 = vcmask 261120
    %v209 = vsel %vm208, %v134, %v171
    %v210 = vsel %vm208, %v136, %v173
    %vm211 = vcmask 523264
    %v212 = vsel %vm211, %v209, %v179
    %v213 = vsel %vm211, %v210, %v181
    %vm214 = vcmask 785408
    %v215 = vsel %vm214, %v212, %v187
    %v216 = vsel %vm214, %v213, %v189
    %v217 = vsel %vm208, %v154, %v195
    %v218 = vsel %vm208, %v156, %v197
    %v219 = vsel %vm211, %v217, %v203
    %v220 = vsel %vm211, %v218, %v205
    %v221 = vpack.c.bf16 %v216, %v215
    %v222 = vpack.c.bf16 %v220, %v219
    %v223 = vld [vmem:[%s3] sm:$0xf]
    %v224 = vld [vmem:[%s3 + $0x4] sm:$0xf]
    %v225 = vld [vmem:[%s3 + $0x8] sm:$0xf]
    %v226 = vld [vmem:[%s3 + $0xc] sm:$0xf]
    %v227 = vld [vmem:[%s3 + $0x10] sm:$0xf]
    %v228 = vld [vmem:[%s3 + $0x14] sm:$0xf]
    %v229 = vld [vmem:[%s3 + $0x18] sm:$0xf]
    %v230 = vld [vmem:[%s3 + $0x1c] sm:$0xf]
    %v231 = vld [vmem:[%s3 + $0x20] sm:$0xf]
    %v232 = vld [vmem:[%s3 + $0x24] sm:$0xf]
    %v233 = vld [vmem:[%s3 + $0x28] sm:$0xf]
    %v234 = vld [vmem:[%s3 + $0x2c] sm:$0xf]
    %v235 = vld [vmem:[%s3 + $0x30] sm:$0xf]
    %v236 = vld [vmem:[%s3 + $0x34] sm:$0xf]
    %v237 = vld [vmem:[%s3 + $0x38] sm:$0xf]
    %v238 = vld [vmem:[%s3 + $0x3c] sm:$0xf]
    %v239 = vld [vmem:[%s3 + $0x40] sm:$0xf]
    %v240 = vld [vmem:[%s3 + $0x44] sm:$0xf]
    %v241 = vld [vmem:[%s3 + $0x48] sm:$0xf]
    %v242 = vld [vmem:[%s3 + $0x4c] sm:$0xf]
    %v243 = vld [vmem:[%s3 + $0x50] sm:$0xf]
    %v244 = vld [vmem:[%s3 + $0x54] sm:$0xf]
    %v245 = vld [vmem:[%s3 + $0x58] sm:$0xf]
    %v246 = vld [vmem:[%s3 + $0x5c] sm:$0xf]
    %v247 = vld [vmem:[%s3 + $0x60] sm:$0xf]
    %v248 = vld [vmem:[%s3 + $0x64] sm:$0xf]
    %v249 = vld [vmem:[%s3 + $0x68] sm:$0xf]
    %v250 = vld [vmem:[%s3 + $0x6c] sm:$0xf]
    %v251 = vld [vmem:[%s4] sm:$0x1]
    %v253 = vperm.slane %v251, 0
    %v283 = vunpack.c.l.b16 %v223
    %v284 = vunpack.c.l.b16 %v224
    %v285 = vunpack.c.l.b16 %v225
    %v286 = vunpack.c.l.b16 %v226
    %v287 = vunpack.c.l.b16 %v227
    %v288 = vunpack.c.l.b16 %v228
    %v289 = vunpack.c.l.b16 %v229
    %v290 = vunpack.c.l.b16 %v230
    %v291 = vunpack.c.l.b16 %v231
    %v292 = vunpack.c.l.b16 %v232
    %v293 = vunpack.c.l.b16 %v233
    %v294 = vunpack.c.l.b16 %v234
    %v295 = vunpack.c.l.b16 %v235
    %v296 = vunpack.c.l.b16 %v236
    %v297 = vunpack.c.l.b16 %v237
    %v298 = vunpack.c.l.b16 %v238
    %v299 = vunpack.c.l.b16 %v239
    %v300 = vunpack.c.l.b16 %v240
    %v301 = vunpack.c.l.b16 %v241
    %v302 = vunpack.c.l.b16 %v242
    %v303 = vunpack.c.l.b16 %v243
    %v304 = vunpack.c.l.b16 %v244
    %v305 = vunpack.c.l.b16 %v245
    %v306 = vunpack.c.l.b16 %v246
    %v307 = vunpack.c.l.b16 %v247
    %v308 = vunpack.c.l.b16 %v248
    %v309 = vunpack.c.l.b16 %v249
    %v310 = vunpack.c.l.b16 %v250
    %v311 = vpack.c.b16 %v284, %v283
    %v312 = vpack.c.b16 %v286, %v285
    %v313 = vpack.c.b16 %v288, %v287
    %v314 = vpack.c.b16 %v290, %v289
    %v315 = vpack.c.b16 %v292, %v291
    %v316 = vpack.c.b16 %v294, %v293
    %v317 = vpack.c.b16 %v296, %v295
    %v318 = vpack.c.b16 %v298, %v297
    %v319 = vpack.c.b16 %v300, %v299
    %v320 = vpack.c.b16 %v302, %v301
    %v321 = vpack.c.b16 %v304, %v303
    %v322 = vpack.c.b16 %v306, %v305
    %v323 = vpack.c.b16 %v308, %v307
    %v324 = vpack.c.b16 %v310, %v309
    %v340 = vsel %vm214, %v222, 0
    %342 = vmatpush.bf16.msra.mxu0 %v318
    %343 = vmatpush.bf16.msra.mxu0 %v317
    %344 = vmatpush.bf16.msra.mxu0 %v316
    %345 = vmatpush.bf16.msra.mxu0 %v315
    %346 = vmatpush.bf16.msra.mxu0 %v314
    %347 = vmatpush.bf16.msra.mxu0 %v313
    %348 = vmatpush.bf16.msra.mxu0 %v312
    %349 = vmatpush.bf16.msra.mxu0 %v311
    %350 = vmatmul.bf16.gmra.mxu0 %v221
    %v351 = vpop.f32.mrf.mxu0
    %v352 = vadd.f32 %v253, %v351
    %v353 = vpop.f32.mrf.mxu0
    %v354 = vadd.f32 %v253, %v353
    %355 = vdwg.mxu0
    %356 = vmatpush.bf16.msra.mxu0 0
    %357 = vmatpush.bf16.msra.mxu0 0
    %358 = vmatpush.bf16.msra.mxu0 %v324
    %359 = vmatpush.bf16.msra.mxu0 %v323
    %360 = vmatpush.bf16.msra.mxu0 %v322
    %361 = vmatpush.bf16.msra.mxu0 %v321
    %362 = vmatpush.bf16.msra.mxu0 %v320
    %363 = vmatpush.bf16.msra.mxu0 %v319
    %364 = vmatmul.bf16.gmra.mxu0 %v340
    %v365 = vpop.f32.mrf.mxu0
    %v366 = vadd.f32 %v352, %v365
    %v367 = vpop.f32.mrf.mxu0
    %v368 = vadd.f32 %v354, %v367
    %369 = vdwg.mxu0
    %v370 = vmax.f32 %v366, 0.0
    %v371 = vmax.f32 %v368, 0.0
    %v372 = vpack.c.bf16 %v371, %v370
    %373 = vmatpush.bf16.msra.mxu0 0
    %374 = vmatpush.bf16.msra.mxu0 0
    %375 = vmatpush.bf16.msra.mxu0 0
    %376 = vmatpush.bf16.msra.mxu0 0
    %377 = vmatpush.bf16.msra.mxu0 0
    %378 = vmatpush.bf16.msra.mxu0 0
    %379 = vmatpush.bf16.msra.mxu0 0
    %380 = vmatpush.bf16.msra.mxu0 %v372
    %381 = vmatmul.bf16.gmra.mxu0 %v104
    %v382 = vpop.f32.mrf.mxu0
    %v383 = vadd.f32 0.0, %v382
    %v384 = vpop.f32.mrf.mxu0
    %v385 = vadd.f32 0.0, %v384
    %386 = vmatmul.bf16.gmra.mxu0 %v107
    %v387 = vpop.f32.mrf.mxu0
    %v388 = vadd.f32 0.0, %v387
    %v389 = vpop.f32.mrf.mxu0
    %v390 = vadd.f32 0.0, %v389
    %391 = vmatmul.bf16.gmra.mxu0 %v110
    %v392 = vpop.f32.mrf.mxu0
    %v393 = vadd.f32 0.0, %v392
    %v394 = vpop.f32.mrf.mxu0
    %v395 = vadd.f32 0.0, %v394
    %396 = vmatmul.bf16.gmra.mxu0 %v113
    %v397 = vpop.f32.mrf.mxu0
    %v398 = vadd.f32 0.0, %v397
    %v399 = vpop.f32.mrf.mxu0
    %v400 = vadd.f32 0.0, %v399
    %401 = vmatmul.bf16.gmra.mxu0 %v116
    %v402 = vpop.f32.mrf.mxu0
    %v403 = vadd.f32 0.0, %v402
    %v404 = vpop.f32.mrf.mxu0
    %v405 = vadd.f32 0.0, %v404
    %406 = vmatmul.bf16.gmra.mxu0 %v119
    %v407 = vpop.f32.mrf.mxu0
    %v408 = vadd.f32 0.0, %v407
    %v409 = vpop.f32.mrf.mxu0
    %v410 = vadd.f32 0.0, %v409
    %411 = vmatmul.bf16.gmra.mxu0 %v122
    %v412 = vpop.f32.mrf.mxu0
    %v413 = vadd.f32 0.0, %v412
    %v414 = vpop.f32.mrf.mxu0
    %v415 = vadd.f32 0.0, %v414
    %416 = vdwg.mxu0
    %419 = vrot.lane.b32.xlu0 %v388, 32
    %v420 = vpop.permute.xlu0 %419
    %421 = vrot.lane.b32.xlu0 %v390, 32
    %v422 = vpop.permute.xlu0 %421
    %427 = vrot.lane.b32.xlu0 %v393, 64
    %v428 = vpop.permute.xlu0 %427
    %429 = vrot.lane.b32.xlu0 %v395, 64
    %v430 = vpop.permute.xlu0 %429
    %435 = vrot.lane.b32.xlu0 %v398, 96
    %v436 = vpop.permute.xlu0 %435
    %437 = vrot.lane.b32.xlu0 %v400, 96
    %v438 = vpop.permute.xlu0 %437
    %443 = vrot.lane.b32.xlu0 %v408, 32
    %v444 = vpop.permute.xlu0 %443
    %445 = vrot.lane.b32.xlu0 %v410, 32
    %v446 = vpop.permute.xlu0 %445
    %451 = vrot.lane.b32.xlu0 %v413, 64
    %v452 = vpop.permute.xlu0 %451
    %453 = vrot.lane.b32.xlu0 %v415, 64
    %v454 = vpop.permute.xlu0 %453
    %v457 = vsel %vm208, %v383, %v420
    %v458 = vsel %vm208, %v385, %v422
    %v459 = vsel %vm211, %v457, %v428
    %v460 = vsel %vm211, %v458, %v430
    %v461 = vsel %vm214, %v459, %v436
    %v462 = vsel %vm214, %v460, %v438
    %v463 = vsel %vm208, %v403, %v444
    %v464 = vsel %vm208, %v405, %v446
    %v465 = vsel %vm211, %v463, %v452
    %v466 = vsel %vm211, %v464, %v454
    %v467 = vpack.c.bf16 %v462, %v461
    %v468 = vpack.c.bf16 %v466, %v465
    %v469 = vld [vmem:[%s5] sm:$0xf]
    %v470 = vld [vmem:[%s5 + $0x4] sm:$0xf]
    %v471 = vld [vmem:[%s5 + $0x8] sm:$0xf]
    %v472 = vld [vmem:[%s5 + $0xc] sm:$0xf]
    %v473 = vld [vmem:[%s5 + $0x10] sm:$0xf]
    %v474 = vld [vmem:[%s5 + $0x14] sm:$0xf]
    %v475 = vld [vmem:[%s5 + $0x18] sm:$0xf]
    %v476 = vld [vmem:[%s5 + $0x1c] sm:$0xf]
    %v477 = vld [vmem:[%s5 + $0x20] sm:$0xf]
    %v478 = vld [vmem:[%s5 + $0x24] sm:$0xf]
    %v479 = vld [vmem:[%s5 + $0x28] sm:$0xf]
    %v480 = vld [vmem:[%s5 + $0x2c] sm:$0xf]
    %v481 = vld [vmem:[%s5 + $0x30] sm:$0xf]
    %v482 = vld [vmem:[%s5 + $0x34] sm:$0xf]
    %v483 = vld [vmem:[%s5 + $0x38] sm:$0xf]
    %v484 = vld [vmem:[%s5 + $0x3c] sm:$0xf]
    %v485 = vld [vmem:[%s5 + $0x40] sm:$0xf]
    %v486 = vld [vmem:[%s5 + $0x44] sm:$0xf]
    %v487 = vld [vmem:[%s5 + $0x48] sm:$0xf]
    %v488 = vld [vmem:[%s5 + $0x4c] sm:$0xf]
    %v489 = vld [vmem:[%s5 + $0x50] sm:$0xf]
    %v490 = vld [vmem:[%s5 + $0x54] sm:$0xf]
    %v491 = vld [vmem:[%s5 + $0x58] sm:$0xf]
    %v492 = vld [vmem:[%s5 + $0x5c] sm:$0xf]
    %v493 = vld [vmem:[%s5 + $0x60] sm:$0xf]
    %v494 = vld [vmem:[%s5 + $0x64] sm:$0xf]
    %v495 = vld [vmem:[%s5 + $0x68] sm:$0xf]
    %v496 = vld [vmem:[%s5 + $0x6c] sm:$0xf]
    %v497 = vld [vmem:[%s6] sm:$0x1]
    %v499 = vperm.slane %v497, 0
    %v529 = vunpack.c.l.b16 %v469
    %v530 = vunpack.c.l.b16 %v470
    %v531 = vunpack.c.l.b16 %v471
    %v532 = vunpack.c.l.b16 %v472
    %v533 = vunpack.c.l.b16 %v473
    %v534 = vunpack.c.l.b16 %v474
    %v535 = vunpack.c.l.b16 %v475
    %v536 = vunpack.c.l.b16 %v476
    %v537 = vunpack.c.l.b16 %v477
    %v538 = vunpack.c.l.b16 %v478
    %v539 = vunpack.c.l.b16 %v479
    %v540 = vunpack.c.l.b16 %v480
    %v541 = vunpack.c.l.b16 %v481
    %v542 = vunpack.c.l.b16 %v482
    %v543 = vunpack.c.l.b16 %v483
    %v544 = vunpack.c.l.b16 %v484
    %v545 = vunpack.c.l.b16 %v485
    %v546 = vunpack.c.l.b16 %v486
    %v547 = vunpack.c.l.b16 %v487
    %v548 = vunpack.c.l.b16 %v488
    %v549 = vunpack.c.l.b16 %v489
    %v550 = vunpack.c.l.b16 %v490
    %v551 = vunpack.c.l.b16 %v491
    %v552 = vunpack.c.l.b16 %v492
    %v553 = vunpack.c.l.b16 %v493
    %v554 = vunpack.c.l.b16 %v494
    %v555 = vunpack.c.l.b16 %v495
    %v556 = vunpack.c.l.b16 %v496
    %v557 = vpack.c.b16 %v530, %v529
    %v558 = vpack.c.b16 %v532, %v531
    %v559 = vpack.c.b16 %v534, %v533
    %v560 = vpack.c.b16 %v536, %v535
    %v561 = vpack.c.b16 %v538, %v537
    %v562 = vpack.c.b16 %v540, %v539
    %v563 = vpack.c.b16 %v542, %v541
    %v564 = vpack.c.b16 %v544, %v543
    %v565 = vpack.c.b16 %v546, %v545
    %v566 = vpack.c.b16 %v548, %v547
    %v567 = vpack.c.b16 %v550, %v549
    %v568 = vpack.c.b16 %v552, %v551
    %v569 = vpack.c.b16 %v554, %v553
    %v570 = vpack.c.b16 %v556, %v555
    %v586 = vsel %vm214, %v468, 0
    %588 = vmatpush.bf16.msra.mxu0 %v564
    %589 = vmatpush.bf16.msra.mxu0 %v563
    %590 = vmatpush.bf16.msra.mxu0 %v562
    %591 = vmatpush.bf16.msra.mxu0 %v561
    %592 = vmatpush.bf16.msra.mxu0 %v560
    %593 = vmatpush.bf16.msra.mxu0 %v559
    %594 = vmatpush.bf16.msra.mxu0 %v558
    %595 = vmatpush.bf16.msra.mxu0 %v557
    %596 = vmatmul.bf16.gmra.mxu0 %v467
    %v597 = vpop.f32.mrf.mxu0
    %v598 = vadd.f32 %v499, %v597
    %v599 = vpop.f32.mrf.mxu0
    %v600 = vadd.f32 %v499, %v599
    %601 = vdwg.mxu0
    %602 = vmatpush.bf16.msra.mxu0 0
    %603 = vmatpush.bf16.msra.mxu0 0
    %604 = vmatpush.bf16.msra.mxu0 %v570
    %605 = vmatpush.bf16.msra.mxu0 %v569
    %606 = vmatpush.bf16.msra.mxu0 %v568
    %607 = vmatpush.bf16.msra.mxu0 %v567
    %608 = vmatpush.bf16.msra.mxu0 %v566
    %609 = vmatpush.bf16.msra.mxu0 %v565
    %610 = vmatmul.bf16.gmra.mxu0 %v586
    %v611 = vpop.f32.mrf.mxu0
    %v612 = vadd.f32 %v598, %v611
    %v613 = vpop.f32.mrf.mxu0
    %v614 = vadd.f32 %v600, %v613
    %615 = vdwg.mxu0
    %v616 = vlaneseq
    %v617 = vand.u32 %v616, 127
    %v618 = vld [vmem:[%s8] sm:$0xff]
    %619 = vset.pattern.permute.xlu0 0
    %620 = vperm.xlu0 %619, %v618
    %v621 = vpop.permute.xlu0 %620
    %vm622 = vcmp.eq.s32.totalorder %v617, %v621
    %v623 = vsel %vm622, 1, 0
    %v624 = vcvt.s32.f32 %v623
    %v625 = vld [vmem:[%s10] sm:$0xff]
    %626 = vset.pattern.permute.xlu0 0
    %627 = vperm.xlu0 %626, %v625
    %v628 = vpop.permute.xlu0 %627
    %vm629 = vcmp.eq.s32.totalorder %v617, %v628
    %v630 = vsel %vm629, 1, 0
    %v631 = vcvt.s32.f32 %v630
    %v632 = vld [vmem:[%s9] sm:$0xff]
    %633 = vset.pattern.permute.xlu0 0
    %634 = vperm.xlu0 %633, %v632
    %v635 = vpop.permute.xlu0 %634
    %vm636 = vcmp.eq.s32.totalorder %v617, %v635
    %v637 = vsel %vm636, 1, 0
    %v638 = vcvt.s32.f32 %v637
    %v640 = vsel %vm102, %v624, 0
    %642 = vmatpush.msra.mxu0 0.0
    %643 = vmatpush.msra.mxu0 0.0
    %644 = vmatpush.msra.mxu0 0.0
    %645 = vmatpush.msra.mxu0 0.0
    %646 = vmatpush.msra.mxu0 0.0
    %647 = vmatpush.msra.mxu0 0.0
    %648 = vmatpush.msra.mxu0 0.0
    %649 = vmatpush.msra.mxu0 0.0
    %650 = vmatpush.msra.mxu0 0.0
    %651 = vmatpush.msra.mxu0 0.0
    %652 = vmatpush.msra.mxu0 0.0
    %653 = vmatpush.msra.mxu0 0.0
    %654 = vmatpush.msra.mxu0 0.0
    %655 = vmatpush.msra.mxu0 0.0
    %656 = vmatpush.msra.mxu0 %v614
    %657 = vmatpush.msra.mxu0 %v612
    %658 = vmatmul.f32.gmra.mxu0 %v640
    %v659 = vpop.f32.mrf.mxu0
    %v660 = vadd.f32 0.0, %v659
    %661 = vdwg.mxu0
    %v663 = vsel %vm102, %v631, 0
    %665 = vmatpush.msra.mxu0 0.0
    %666 = vmatpush.msra.mxu0 0.0
    %667 = vmatpush.msra.mxu0 0.0
    %668 = vmatpush.msra.mxu0 0.0
    %669 = vmatpush.msra.mxu0 0.0
    %670 = vmatpush.msra.mxu0 0.0
    %671 = vmatpush.msra.mxu0 0.0
    %672 = vmatpush.msra.mxu0 0.0
    %673 = vmatpush.msra.mxu0 0.0
    %674 = vmatpush.msra.mxu0 0.0
    %675 = vmatpush.msra.mxu0 0.0
    %676 = vmatpush.msra.mxu0 0.0
    %677 = vmatpush.msra.mxu0 0.0
    %678 = vmatpush.msra.mxu0 0.0
    %679 = vmatpush.msra.mxu0 %v614
    %680 = vmatpush.msra.mxu0 %v612
    %681 = vmatmul.f32.gmra.mxu0 %v663
    %v682 = vpop.f32.mrf.mxu0
    %v683 = vadd.f32 0.0, %v682
    %684 = vdwg.mxu0
    %v685 = vld [vmem:[%s7] sm:$0x7]
    %vm686 = vcmask 23552
    %v688 = vsel %vm686, %v638, 0
    %vm690 = vcmask 1042432
    %v692 = vsel %vm690, %v685, 0
    %694 = vmatpush.msra.mxu0 0.0
    %695 = vmatpush.msra.mxu0 0.0
    %696 = vmatpush.msra.mxu0 0.0
    %697 = vmatpush.msra.mxu0 0.0
    %698 = vmatpush.msra.mxu0 0.0
    %699 = vmatpush.msra.mxu0 0.0
    %700 = vmatpush.msra.mxu0 0.0
    %701 = vmatpush.msra.mxu0 0.0
    %702 = vmatpush.msra.mxu0 0.0
    %703 = vmatpush.msra.mxu0 0.0
    %704 = vmatpush.msra.mxu0 0.0
    %705 = vmatpush.msra.mxu0 0.0
    %706 = vmatpush.msra.mxu0 0.0
    %707 = vmatpush.msra.mxu0 0.0
    %708 = vmatpush.msra.mxu0 0.0
    %709 = vmatpush.msra.mxu0 %v692
    %710 = vmatmul.f32.gmra.mxu0 %v688
    %v711 = vpop.f32.mrf.mxu0
    %v712 = vadd.f32 0.0, %v711
    %713 = vdwg.mxu0
    %v714 = vmul.f32 %v660, %v712
    %v715 = vmul.f32 %v714, %v683
    %v716 = vsel %vm208, %v715, 0.0
    %717 = vadd.xlane.f32.xlu0 %v716
    %v718 = vpop.xlane.xlu0 %717
    %vm719 = vcmask 7168
    %720 = vst.msk [vmem:[%s11] sm:$0xff] %vm719, %v718
    %v721 = vld [vmem:[%s7] sm:$0x7]
    %v722 = vmul.f32 %v721, %v721
    %vm723 = vcmask 256000
    %v724 = vsel %vm723, %v722, 0.0
    %725 = vadd.xlane.f32.xlu0 %v724
    %v726 = vpop.xlane.xlu0 %725
    %v727 = vsel %vm690, %v726, 0.0
    %v728 = vrot.slane %v727, 4
    %v729 = vadd.f32 %v727, %v728
    %v730 = vrot.slane %v729, 2
    %v731 = vadd.f32 %v729, %v730
    %v732 = vrot.slane %v731, 1
    %v733 = vadd.f32 %v731, %v732
    %vm734 = vcmask 0
    %735 = vst.msk [vmem:[#allocation2] sm:$0x1] %vm734, %v733
    // Predicated region
    $region46: #{relation_predictor_forward.1} parent=1 // pred_check
      _
    $region47: #{relation_predictor_forward.1} parent=1 // pred_check_branch
      %737 = sbr.rel (0) target = $region49
    $region48: #{relation_predictor_forward.1} parent=1 // pred_region
      _
    $region49: #{relation_predictor_forward.1} parent=1 // pred_fallthru
      _
    // Predicated region
    $region50: #{relation_predictor_forward.1} parent=1 // pred_check
      _
    $region51: #{relation_predictor_forward.1} parent=1 // pred_check_branch
      %739 = sbr.rel (0) target = $region53
    $region52: #{relation_predictor_forward.1} parent=1 // pred_region
      %741 = vsyncadd [#allocation3], 0
      %s743 = sshll.u32 [#allocation2], 4
      %s744 = int_to_ptr.vmem [resolvable:$true] %s743
      %s745 = sshll.u32 %s12, 4
      %s746 = int_to_ptr.hbm [resolvable:$true] %s745
      %748 = dma.vmem_to_hbm [thread:$0]  %s744, 16, %s746, [#allocation3]
    $region53: #{relation_predictor_forward.1} parent=1 // pred_fallthru
      _
    // Predicated region
    $region54: #{relation_predictor_forward.1} parent=1 // pred_check
      _
    $region55: #{relation_predictor_forward.1} parent=1 // pred_check_branch
      %750 = sbr.rel (0) target = $region57
    $region56: #{relation_predictor_forward.1} parent=1 // pred_region
      _
    $region57: #{relation_predictor_forward.1} parent=1 // pred_fallthru
      _
    // Predicated region
    $region58: #{relation_predictor_forward.1} parent=1 // pred_check
      _
    $region59: #{relation_predictor_forward.1} parent=1 // pred_check_branch
      %752 = sbr.rel (0) target = $region61
    $region60: #{relation_predictor_forward.1} parent=1 // pred_region
      %754 = dma.done [#allocation3], 16
    $region61: #{relation_predictor_forward.1} parent=1 // pred_fallthru
      _
    %755 = vsyncpa [#allocation3], 1

</llo_original>
